<compile_context>
chip_gen: v7x
topology: tpu7x:2x2x1
jax: 0.10.0
libtpu: 0.0.40
codegen_flags: <defaults>
</compile_context>

<pallas_src>
import functools

import jax
import jax.numpy as jnp
from jax.experimental import pallas as pl
from jax.experimental.pallas import tpu as pltpu


def _dc_kernel(lam_ref,
               xr_ref, xi_ref, yr_ref, yi_ref, m_ref,
               fh_ref, fw_ref,
               or_ref, oi_ref, *, scale):
    """Data consistency for one block of tb images.

    fh_ref : (2H, H) bf16, rows    = [F_H.real ; F_H.imag]
    fw_ref : (W, 2W) bf16, columns = [F_W.real | F_W.imag]
    """
    f32, bf16 = jnp.float32, jnp.bfloat16
    tb, H, W = xr_ref.shape
    lam = lam_ref[0, 0]
    dc_w = 1.0 - lam                       # weight on (y - A_x) at sampled k

    fh = fh_ref[...]
    fw = fw_ref[...]

    def mm(a, b):
        return jnp.dot(a, b, preferred_element_type=f32)

    # ---- stage 1: T_b = F_H @ X_b  (stacked DFT: 2 MXU calls per image) ----
    tr_parts, ti_parts = [], []
    for b in range(tb):
        pr = mm(fh, xr_ref[b].astype(bf16))       # [re@xr ; im@xr]  (2H, W)
        pi = mm(fh, xi_ref[b].astype(bf16))       # [re@xi ; im@xi]
        tr_parts.append((pr[:H] - pi[H:]).astype(bf16))
        ti_parts.append((pi[:H] + pr[H:]).astype(bf16))
    tr = jnp.concatenate(tr_parts, axis=0)        # (tb*H, W) bf16
    ti = jnp.concatenate(ti_parts, axis=0)

    # ---- stage 2 (batched over the block): A_x = T @ F_W -------------------
    pr = mm(tr, fw)                               # [T.re@re | T.re@im] (tb*H,2W)
    pi = mm(ti, fw)                               # [T.im@re | T.im@im]
    axr = pr[:, :W] - pi[:, W:]                   # (tb*H, W) f32
    axi = pr[:, W:] + pi[:, :W]

    # ---- stage 3: per-image DC combine + U_b = conj(F_H) @ K_b -------------
    ur_parts, ui_parts = [], []
    for b in range(tb):
        rows = slice(b * H, (b + 1) * H)
        c = m_ref[b].astype(f32) * dc_w
        kr = axr[rows] + c * (yr_ref[b].astype(f32) - axr[rows])
        ki = axi[rows] + c * (yi_ref[b].astype(f32) - axi[rows])
        pr = mm(fh, kr.astype(bf16))              # [re@kr ; im@kr]
        pi = mm(fh, ki.astype(bf16))              # [re@ki ; im@ki]
        ur_parts.append((pr[:H] + pi[H:]).astype(bf16))   # conj(F_H) @ K
        ui_parts.append((pi[:H] - pr[H:]).astype(bf16))
    ur = jnp.concatenate(ur_parts, axis=0)        # (tb*H, W) bf16
    ui = jnp.concatenate(ui_parts, axis=0)

    # ---- stage 4 (batched): out = U @ conj(F_W) / (H*W) ---------------------
    pr = mm(ur, fw)
    pi = mm(ui, fw)
    vr = (pr[:, :W] + pi[:, W:]) * scale
    vi = (pi[:, :W] - pr[:, W:]) * scale
    for b in range(tb):
        rows = slice(b * H, (b + 1) * H)
        or_ref[b] = vr[rows].astype(or_ref.dtype)
        oi_ref[b] = vi[rows].astype(oi_ref.dtype)


def _stacked_dft(n, stack_axis):
    """n-point DFT matrix with real/imag parts stacked along stack_axis (bf16)."""
    k = jnp.arange(n, dtype=jnp.uint32)
    # integer (k*k') mod n BEFORE the float multiply keeps cos/sin accurate at
    # large n; the uint32 product is exact for n <= 65536.
    prod = (k[:, None] * k[None, :]) % jnp.uint32(n)
    ang = (-2.0 * jnp.pi / n) * prod.astype(jnp.float32)
    return jnp.concatenate([jnp.cos(ang), jnp.sin(ang)],
                           axis=stack_axis).astype(jnp.bfloat16)


def _vmem_limit_bytes():
    try:
        cap = int(pltpu.get_tpu_info().vmem_capacity_bytes)
    except Exception:
        cap = 64 << 20                       # conservative: v7x per-TC VMEM
    return max(32 << 20, (cap * 3) // 4)     # ~25% headroom for the compiler


def _num_tensorcores():
    """Best-effort TensorCore count (2 on v7x megacore, else 1)."""
    try:
        info = pltpu.get_tpu_info()
        for name in ("num_cores", "core_count", "num_tensorcores",
                     "tensorcores_per_chip", "num_cores_per_chip"):
            v = getattr(info, name, None)
            if v is None:
                continue
            try:
                v = int(v)
            except (TypeError, ValueError):
                continue
            if v > 0:
                return max(1, min(v, 2))
    except Exception:
        pass
    return 2    # unknown -> assume megacore so both cores get work


def _pick_tb(batch, h, w, in_bytes, const_bytes, vmem_limit, n_cores):
    """Images per grid step: as many as the VMEM budget allows, while keeping
    the grid long enough to feed every TensorCore."""
    plane = h * w
    # Pipelined planes: 5 inputs (native dtype) + 2 f32 outputs, x2 buffers.
    per_tb = 2 * (5 * in_bytes + 2 * 4) * plane
    # Peak live batched intermediates: bf16 T/U pair + two f32 (tb*H,2W)
    # stacked matmul outputs + one f32 complex pair.
    per_tb += (2 * 2 + 2 * 2 * 4 + 2 * 4) * plane
    fixed = const_bytes + (4 << 20)          # resident DFT matrices + headroom
    cap = (vmem_limit - fixed) // per_tb if vmem_limit > fixed else 1
    cap = int(max(1, min(cap, 8, batch)))
    want_grid = min(n_cores, batch)
    best = 1
    for t in range(1, cap + 1):
        if batch % t == 0 and batch // t >= want_grid:
            best = t
    return best


def dc_layer(x_re, x_im, y_re, y_im, mask, lambda_, out_dtype=jnp.float32):
    """Pallas implementation of DCLayer.forward.

    x_re/x_im : (B, H, W) float  image-space input (real / imag)
    y_re/y_im : (B, H, W) float  measured k-space  (real / imag)
    mask      : (B, H, W) float/bool sampling mask (0/1)
    lambda_   : scalar float     the (learnable) DC weight
    Inputs may be float32 or bfloat16; bf16 inputs halve the kernel's HBM
    read traffic (matmul operands are bf16 either way).
    returns   : (out_re, out_im), each (B, H, W) out_dtype
    """
    def prep(a):
        a = jnp.asarray(a)
        if not jnp.issubdtype(a.dtype, jnp.floating):
            a = a.astype(jnp.float32)
        return a

    xr, xi, yr, yi, m = map(prep, (x_re, x_im, y_re, y_im, mask))
    B, H, W = xr.shape

    fh = _stacked_dft(H, stack_axis=0)       # (2H, H) bf16
    fw = _stacked_dft(W, stack_axis=1)       # (W, 2W) bf16
    lam = jnp.asarray(lambda_, jnp.float32).reshape(1, 1)

    vmem_limit = _vmem_limit_bytes()
    in_bytes = max(a.dtype.itemsize for a in (xr, xi, yr, yi, m))
    const_bytes = (fh.size + fw.size) * 2    # bf16
    tb = _pick_tb(B, H, W, in_bytes, const_bytes, vmem_limit,
                  _num_tensorcores())

    img_spec = pl.BlockSpec((tb, H, W), lambda g: (g, 0, 0))
    vmem_full = pl.BlockSpec(memory_space=pltpu.MemorySpace.VMEM)
    smem_full = pl.BlockSpec(memory_space=pltpu.MemorySpace.SMEM)

    out_re, out_im = pl.pallas_call(
        functools.partial(_dc_kernel, scale=1.0 / float(H * W)),
        out_shape=(jax.ShapeDtypeStruct((B, H, W), out_dtype),
                   jax.ShapeDtypeStruct((B, H, W), out_dtype)),
        grid_spec=pltpu.PrefetchScalarGridSpec(
            num_scalar_prefetch=0,
            grid=(B // tb,),
            in_specs=[
                smem_full,                                       # lambda
                img_spec, img_spec, img_spec, img_spec, img_spec,  # x, y, mask
                vmem_full, vmem_full,                            # DFT matrices
            ],
            out_specs=[img_spec, img_spec],
        ),
        compiler_params=pltpu.CompilerParams(
            dimension_semantics=("parallel",),
            vmem_limit_bytes=vmem_limit),
    )(lam, xr, xi, yr, yi, m, fh, fw)

    return out_re, out_im


def _reference(x_re, x_im, y_re, y_im, mask, lambda_):
    x = x_re + 1j * x_im
    y = y_re + 1j * y_im
    A_x = jnp.fft.fft2(x, axes=(-2, -1))
    k_dc = (1 - mask) * A_x + mask * (lambda_ * A_x + (1 - lambda_) * y)
    x_dc = jnp.fft.ifft2(k_dc, axes=(-2, -1))
    return jnp.real(x_dc), jnp.imag(x_dc)


if __name__ == "__main__":
    B, H, W = 2, 16, 16
    key = jax.random.PRNGKey(0)
    k1, k2, k3, k4, k5 = jax.random.split(key, 5)

    x_re = jax.random.normal(k1, (B, H, W), jnp.float32)
    x_im = jax.random.normal(k2, (B, H, W), jnp.float32)
    y_re = jax.random.normal(k3, (B, H, W), jnp.float32)
    y_im = jax.random.normal(k4, (B, H, W), jnp.float32)
    mask = (jax.random.uniform(k5, (B, H, W)) > 0.5).astype(jnp.float32)

    # DCLayer(lambda_init=0.1) -> deterministic scalar parameter value.
    lambda_ = 0.1

    out_re, out_im = dc_layer(x_re, x_im, y_re, y_im, mask, lambda_)
    jax.block_until_ready((out_re, out_im))

    ref_re, ref_im = _reference(x_re, x_im, y_re, y_im, mask, lambda_)

    # bf16 matmul operands (f32 accumulation) -> loosened tolerances.
    max_err = max(float(jnp.max(jnp.abs(out_re - ref_re))),
                  float(jnp.max(jnp.abs(out_im - ref_im))))
    rel_err = float(
        jnp.linalg.norm(jnp.stack([out_re - ref_re, out_im - ref_im]))
        / jnp.linalg.norm(jnp.stack([ref_re, ref_im])))
    assert max_err < 8e-2, f"max abs err {max_err}"
    assert rel_err < 3e-2, f"rel l2 err {rel_err}"

    print("KERNEL_OK")
</pallas_src>

<mosaic_0001>
module attributes {stable_mosaic.version = 11 : i64} {
  func.func @_dc_kernel(%arg0: i32, %arg1: memref<1x1xf32, #tpu.memory_space<smem>>, %arg2: memref<1x16x16xf32, #tpu.memory_space<vmem>>, %arg3: memref<1x16x16xf32, #tpu.memory_space<vmem>>, %arg4: memref<1x16x16xf32, #tpu.memory_space<vmem>>, %arg5: memref<1x16x16xf32, #tpu.memory_space<vmem>>, %arg6: memref<1x16x16xf32, #tpu.memory_space<vmem>>, %arg7: memref<32x16xbf16, #tpu.memory_space<vmem>>, %arg8: memref<16x32xbf16, #tpu.memory_space<vmem>>, %arg9: memref<1x16x16xf32, #tpu.memory_space<vmem>>, %arg10: memref<1x16x16xf32, #tpu.memory_space<vmem>>) attributes {dimension_semantics = [#tpu.dimension_semantics<parallel>], iteration_bounds = array<i64: 2>, scalar_prefetch = 0 : i64, scratch_operands = 0 : i64, tpu.core_type = #tpu.core_type<tc>, window_params = [{transform_indices = @transform_0, window_bounds = array<i64: 1, 1>}, {transform_indices = @transform_1, window_bounds = array<i64: 1, 16, 16>}, {transform_indices = @transform_2, window_bounds = array<i64: 1, 16, 16>}, {transform_indices = @transform_3, window_bounds = array<i64: 1, 16, 16>}, {transform_indices = @transform_4, window_bounds = array<i64: 1, 16, 16>}, {transform_indices = @transform_5, window_bounds = array<i64: 1, 16, 16>}, {pipeline_mode = #tpu.pipeline_mode<synchronous>, transform_indices = @transform_6, window_bounds = array<i64: 32, 16>}, {pipeline_mode = #tpu.pipeline_mode<synchronous>, transform_indices = @transform_7, window_bounds = array<i64: 16, 32>}, {transform_indices = @transform_8, window_bounds = array<i64: 1, 16, 16>}, {transform_indices = @transform_9, window_bounds = array<i64: 1, 16, 16>}]} {
    %c0 = arith.constant 0 : index
    %c0_0 = arith.constant 0 : index
    %0 = memref.load %arg1[%c0, %c0_0] : memref<1x1xf32, #tpu.memory_space<smem>>
    %cst = arith.constant 1.000000e+00 : f32
    %1 = arith.subf %cst, %0 : f32
    %c0_1 = arith.constant 0 : index
    %c0_2 = arith.constant 0 : index
    %2 = vector.load %arg7[%c0_1, %c0_2] : memref<32x16xbf16, #tpu.memory_space<vmem>>, vector<32x16xbf16>
    %c0_3 = arith.constant 0 : index
    %c0_4 = arith.constant 0 : index
    %3 = vector.load %arg8[%c0_3, %c0_4] : memref<16x32xbf16, #tpu.memory_space<vmem>>, vector<16x32xbf16>
    %c0_5 = arith.constant 0 : index
    %c0_6 = arith.constant 0 : index
    %c0_7 = arith.constant 0 : index
    %4 = vector.load %arg2[%c0_5, %c0_6, %c0_7] : memref<1x16x16xf32, #tpu.memory_space<vmem>>, vector<1x16x16xf32>
    %5 = vector.shape_cast %4 : vector<1x16x16xf32> to vector<16x16xf32>
    %6 = arith.truncf %5 : vector<16x16xf32> to vector<16x16xbf16>
    %cst_8 = arith.constant dense<0.000000e+00> : vector<32x16xf32>
    %7 = tpu.matmul %2, %6, %cst_8 {dimension_numbers = #tpu.dot_dimension_numbers<[1], [0], [0], [1], [0, 0, 1, 1], [], []>} : vector<32x16xbf16>, vector<16x16xbf16>, vector<32x16xf32> -> vector<32x16xf32>
    %c0_9 = arith.constant 0 : index
    %c0_10 = arith.constant 0 : index
    %c0_11 = arith.constant 0 : index
    %8 = vector.load %arg3[%c0_9, %c0_10, %c0_11] : memref<1x16x16xf32, #tpu.memory_space<vmem>>, vector<1x16x16xf32>
    %9 = vector.shape_cast %8 : vector<1x16x16xf32> to vector<16x16xf32>
    %10 = arith.truncf %9 : vector<16x16xf32> to vector<16x16xbf16>
    %cst_12 = arith.constant dense<0.000000e+00> : vector<32x16xf32>
    %11 = tpu.matmul %2, %10, %cst_12 {dimension_numbers = #tpu.dot_dimension_numbers<[1], [0], [0], [1], [0, 0, 1, 1], [], []>} : vector<32x16xbf16>, vector<16x16xbf16>, vector<32x16xf32> -> vector<32x16xf32>
    %12 = vector.extract_strided_slice %7 {offsets = [0, 0], sizes = [16, 16], strides = [1, 1]} : vector<32x16xf32> to vector<16x16xf32>
    %13 = vector.extract_strided_slice %11 {offsets = [16, 0], sizes = [16, 16], strides = [1, 1]} : vector<32x16xf32> to vector<16x16xf32>
    %14 = arith.subf %12, %13 : vector<16x16xf32>
    %15 = arith.truncf %14 : vector<16x16xf32> to vector<16x16xbf16>
    %16 = vector.extract_strided_slice %11 {offsets = [0, 0], sizes = [16, 16], strides = [1, 1]} : vector<32x16xf32> to vector<16x16xf32>
    %17 = vector.extract_strided_slice %7 {offsets = [16, 0], sizes = [16, 16], strides = [1, 1]} : vector<32x16xf32> to vector<16x16xf32>
    %18 = arith.addf %16, %17 : vector<16x16xf32>
    %19 = arith.truncf %18 : vector<16x16xf32> to vector<16x16xbf16>
    %cst_13 = arith.constant dense<0.000000e+00> : vector<16x32xf32>
    %20 = tpu.matmul %15, %3, %cst_13 {dimension_numbers = #tpu.dot_dimension_numbers<[1], [0], [0], [1], [0, 0, 1, 1], [], []>} : vector<16x16xbf16>, vector<16x32xbf16>, vector<16x32xf32> -> vector<16x32xf32>
    %cst_14 = arith.constant dense<0.000000e+00> : vector<16x32xf32>
    %21 = tpu.matmul %19, %3, %cst_14 {dimension_numbers = #tpu.dot_dimension_numbers<[1], [0], [0], [1], [0, 0, 1, 1], [], []>} : vector<16x16xbf16>, vector<16x32xbf16>, vector<16x32xf32> -> vector<16x32xf32>
    %22 = vector.extract_strided_slice %20 {offsets = [0, 0], sizes = [16, 16], strides = [1, 1]} : vector<16x32xf32> to vector<16x16xf32>
    %23 = vector.extract_strided_slice %21 {offsets = [0, 16], sizes = [16, 16], strides = [1, 1]} : vector<16x32xf32> to vector<16x16xf32>
    %24 = arith.subf %22, %23 : vector<16x16xf32>
    %25 = vector.extract_strided_slice %20 {offsets = [0, 16], sizes = [16, 16], strides = [1, 1]} : vector<16x32xf32> to vector<16x16xf32>
    %26 = vector.extract_strided_slice %21 {offsets = [0, 0], sizes = [16, 16], strides = [1, 1]} : vector<16x32xf32> to vector<16x16xf32>
    %27 = arith.addf %25, %26 : vector<16x16xf32>
    %c0_15 = arith.constant 0 : index
    %c0_16 = arith.constant 0 : index
    %c0_17 = arith.constant 0 : index
    %28 = vector.load %arg6[%c0_15, %c0_16, %c0_17] : memref<1x16x16xf32, #tpu.memory_space<vmem>>, vector<1x16x16xf32>
    %29 = vector.shape_cast %28 : vector<1x16x16xf32> to vector<16x16xf32>
    %30 = vector.broadcast %1 : f32 to vector<16x16xf32>
    %31 = arith.mulf %29, %30 : vector<16x16xf32>
    %c0_18 = arith.constant 0 : index
    %c0_19 = arith.constant 0 : index
    %c0_20 = arith.constant 0 : index
    %32 = vector.load %arg4[%c0_18, %c0_19, %c0_20] : memref<1x16x16xf32, #tpu.memory_space<vmem>>, vector<1x16x16xf32>
    %33 = vector.shape_cast %32 : vector<1x16x16xf32> to vector<16x16xf32>
    %34 = arith.subf %33, %24 : vector<16x16xf32>
    %35 = arith.mulf %31, %34 : vector<16x16xf32>
    %36 = arith.addf %24, %35 : vector<16x16xf32>
    %c0_21 = arith.constant 0 : index
    %c0_22 = arith.constant 0 : index
    %c0_23 = arith.constant 0 : index
    %37 = vector.load %arg5[%c0_21, %c0_22, %c0_23] : memref<1x16x16xf32, #tpu.memory_space<vmem>>, vector<1x16x16xf32>
    %38 = vector.shape_cast %37 : vector<1x16x16xf32> to vector<16x16xf32>
    %39 = arith.subf %38, %27 : vector<16x16xf32>
    %40 = arith.mulf %31, %39 : vector<16x16xf32>
    %41 = arith.addf %27, %40 : vector<16x16xf32>
    %42 = arith.truncf %36 : vector<16x16xf32> to vector<16x16xbf16>
    %cst_24 = arith.constant dense<0.000000e+00> : vector<32x16xf32>
    %43 = tpu.matmul %2, %42, %cst_24 {dimension_numbers = #tpu.dot_dimension_numbers<[1], [0], [0], [1], [0, 0, 1, 1], [], []>} : vector<32x16xbf16>, vector<16x16xbf16>, vector<32x16xf32> -> vector<32x16xf32>
    %44 = arith.truncf %41 : vector<16x16xf32> to vector<16x16xbf16>
    %cst_25 = arith.constant dense<0.000000e+00> : vector<32x16xf32>
    %45 = tpu.matmul %2, %44, %cst_25 {dimension_numbers = #tpu.dot_dimension_numbers<[1], [0], [0], [1], [0, 0, 1, 1], [], []>} : vector<32x16xbf16>, vector<16x16xbf16>, vector<32x16xf32> -> vector<32x16xf32>
    %46 = vector.extract_strided_slice %43 {offsets = [0, 0], sizes = [16, 16], strides = [1, 1]} : vector<32x16xf32> to vector<16x16xf32>
    %47 = vector.extract_strided_slice %45 {offsets = [16, 0], sizes = [16, 16], strides = [1, 1]} : vector<32x16xf32> to vector<16x16xf32>
    %48 = arith.addf %46, %47 : vector<16x16xf32>
    %49 = arith.truncf %48 : vector<16x16xf32> to vector<16x16xbf16>
    %50 = vector.extract_strided_slice %45 {offsets = [0, 0], sizes = [16, 16], strides = [1, 1]} : vector<32x16xf32> to vector<16x16xf32>
    %51 = vector.extract_strided_slice %43 {offsets = [16, 0], sizes = [16, 16], strides = [1, 1]} : vector<32x16xf32> to vector<16x16xf32>
    %52 = arith.subf %50, %51 : vector<16x16xf32>
    %53 = arith.truncf %52 : vector<16x16xf32> to vector<16x16xbf16>
    %cst_26 = arith.constant dense<0.000000e+00> : vector<16x32xf32>
    %54 = tpu.matmul %49, %3, %cst_26 {dimension_numbers = #tpu.dot_dimension_numbers<[1], [0], [0], [1], [0, 0, 1, 1], [], []>} : vector<16x16xbf16>, vector<16x32xbf16>, vector<16x32xf32> -> vector<16x32xf32>
    %cst_27 = arith.constant dense<0.000000e+00> : vector<16x32xf32>
    %55 = tpu.matmul %53, %3, %cst_27 {dimension_numbers = #tpu.dot_dimension_numbers<[1], [0], [0], [1], [0, 0, 1, 1], [], []>} : vector<16x16xbf16>, vector<16x32xbf16>, vector<16x32xf32> -> vector<16x32xf32>
    %56 = vector.extract_strided_slice %54 {offsets = [0, 0], sizes = [16, 16], strides = [1, 1]} : vector<16x32xf32> to vector<16x16xf32>
    %57 = vector.extract_strided_slice %55 {offsets = [0, 16], sizes = [16, 16], strides = [1, 1]} : vector<16x32xf32> to vector<16x16xf32>
    %58 = arith.addf %56, %57 : vector<16x16xf32>
    %cst_28 = arith.constant 3.906250e-03 : f32
    %59 = vector.broadcast %cst_28 : f32 to vector<16x16xf32>
    %60 = arith.mulf %58, %59 : vector<16x16xf32>
    %61 = vector.extract_strided_slice %55 {offsets = [0, 0], sizes = [16, 16], strides = [1, 1]} : vector<16x32xf32> to vector<16x16xf32>
    %62 = vector.extract_strided_slice %54 {offsets = [0, 16], sizes = [16, 16], strides = [1, 1]} : vector<16x32xf32> to vector<16x16xf32>
    %63 = arith.subf %61, %62 : vector<16x16xf32>
    %cst_29 = arith.constant 3.906250e-03 : f32
    %64 = vector.broadcast %cst_29 : f32 to vector<16x16xf32>
    %65 = arith.mulf %63, %64 : vector<16x16xf32>
    %c0_30 = arith.constant 0 : index
    %c0_31 = arith.constant 0 : index
    %c0_32 = arith.constant 0 : index
    %66 = vector.load %arg9[%c0_30, %c0_31, %c0_32] : memref<1x16x16xf32, #tpu.memory_space<vmem>>, vector<1x16x16xf32>
    %67 = vector.shape_cast %66 : vector<1x16x16xf32> to vector<16x16xf32>
    %68 = vector.shape_cast %60 : vector<16x16xf32> to vector<1x16x16xf32>
    tpu.vector_store %arg9[%c0_30, %c0_31, %c0_32], %68 {strides = array<i32>} : memref<1x16x16xf32, #tpu.memory_space<vmem>>, vector<1x16x16xf32>,
    %c0_33 = arith.constant 0 : index
    %c0_34 = arith.constant 0 : index
    %c0_35 = arith.constant 0 : index
    %69 = vector.load %arg10[%c0_33, %c0_34, %c0_35] : memref<1x16x16xf32, #tpu.memory_space<vmem>>, vector<1x16x16xf32>
    %70 = vector.shape_cast %69 : vector<1x16x16xf32> to vector<16x16xf32>
    %71 = vector.shape_cast %65 : vector<16x16xf32> to vector<1x16x16xf32>
    tpu.vector_store %arg10[%c0_33, %c0_34, %c0_35], %71 {strides = array<i32>} : memref<1x16x16xf32, #tpu.memory_space<vmem>>, vector<1x16x16xf32>,
    return
  }
  func.func @transform_0(%arg0: i32) -> (i32, i32) {
    %c0_i32 = arith.constant 0 : i32
    %c0_i32_0 = arith.constant 0 : i32
    %c0_i32_1 = arith.constant 0 : i32
    return %c0_i32, %c0_i32_0 : i32, i32
  }
  func.func @transform_1(%arg0: i32) -> (i32, i32, i32) {
    %c0_i32 = arith.constant 0 : i32
    %c0_i32_0 = arith.constant 0 : i32
    %c0_i32_1 = arith.constant 0 : i32
    return %arg0, %c0_i32, %c0_i32_0 : i32, i32, i32
  }
  func.func @transform_2(%arg0: i32) -> (i32, i32, i32) {
    %c0_i32 = arith.constant 0 : i32
    %c0_i32_0 = arith.constant 0 : i32
    %c0_i32_1 = arith.constant 0 : i32
    return %arg0, %c0_i32, %c0_i32_0 : i32, i32, i32
  }
  func.func @transform_3(%arg0: i32) -> (i32, i32, i32) {
    %c0_i32 = arith.constant 0 : i32
    %c0_i32_0 = arith.constant 0 : i32
    %c0_i32_1 = arith.constant 0 : i32
    return %arg0, %c0_i32, %c0_i32_0 : i32, i32, i32
  }
  func.func @transform_4(%arg0: i32) -> (i32, i32, i32) {
    %c0_i32 = arith.constant 0 : i32
    %c0_i32_0 = arith.constant 0 : i32
    %c0_i32_1 = arith.constant 0 : i32
    return %arg0, %c0_i32, %c0_i32_0 : i32, i32, i32
  }
  func.func @transform_5(%arg0: i32) -> (i32, i32, i32) {
    %c0_i32 = arith.constant 0 : i32
    %c0_i32_0 = arith.constant 0 : i32
    %c0_i32_1 = arith.constant 0 : i32
    return %arg0, %c0_i32, %c0_i32_0 : i32, i32, i32
  }
  func.func @transform_6(%arg0: i32) -> (i32, i32) {
    %c0_i32 = arith.constant 0 : i32
    %c0_i32_0 = arith.constant 0 : i32
    %c0_i32_1 = arith.constant 0 : i32
    return %c0_i32, %c0_i32_0 : i32, i32
  }
  func.func @transform_7(%arg0: i32) -> (i32, i32) {
    %c0_i32 = arith.constant 0 : i32
    %c0_i32_0 = arith.constant 0 : i32
    %c0_i32_1 = arith.constant 0 : i32
    return %c0_i32, %c0_i32_0 : i32, i32
  }
  func.func @transform_8(%arg0: i32) -> (i32, i32, i32) {
    %c0_i32 = arith.constant 0 : i32
    %c0_i32_0 = arith.constant 0 : i32
    %c0_i32_1 = arith.constant 0 : i32
    return %arg0, %c0_i32, %c0_i32_0 : i32, i32, i32
  }
  func.func @transform_9(%arg0: i32) -> (i32, i32, i32) {
    %c0_i32 = arith.constant 0 : i32
    %c0_i32_0 = arith.constant 0 : i32
    %c0_i32_1 = arith.constant 0 : i32
    return %arg0, %c0_i32, %c0_i32_0 : i32, i32, i32
  }
}

</mosaic_0001>

<llo_original>
// kernel: tpu_custom_call.1
$region0: #{tpu_custom_call.1}
  #allocation0 [shape = 'u32[]', space=smem, size = 0x4, offset = 0x4, fixed_abs, tag = 'smem constant byte address 0x4 - core index']
  #allocation1 [shape = 'u32[144,128]{1,0:T(1,128)}', space=vmem, size = 0x12000, scoped, tag = 'internal scratch']
  #allocation2 [shape = 'f32[1,1]{1,0:T(1,128)S(6)}', space=smem, size = 0x200, scoped, tag = 'scoped memory for tpu_custom_call.1']
  %s0 = inlined_call_operand.<no memory space> [shape: f32[1,1], index: 0, kind: input, shape index: {}]
  %s1 = inlined_call_operand.hbm [shape: f32[2,16,16], index: 1, kind: input, shape index: {}]
  %s2 = inlined_call_operand.hbm [shape: f32[2,16,16], index: 2, kind: input, shape index: {}]
  %s3 = inlined_call_operand.vmem [shape: f32[2,16,16], index: 3, kind: input, shape index: {}]
  %s4 = inlined_call_operand.hbm [shape: f32[2,16,16], index: 4, kind: input, shape index: {}]
  %s5 = inlined_call_operand.hbm [shape: f32[2,16,16], index: 5, kind: input, shape index: {}]
  %s6 = inlined_call_operand.vmem [shape: bf16[32,16], index: 6, kind: input, shape index: {}]
  %s7 = inlined_call_operand.vmem [shape: bf16[16,32], index: 7, kind: input, shape index: {}]
  %s8 = inlined_call_operand.hbm [shape: f32[2,16,16], index: 8, kind: output, shape index: {0}]
  %s9 = inlined_call_operand.hbm [shape: f32[2,16,16], index: 9, kind: output, shape index: {1}]
  %10 = xla_tuple %s8, %s9
  %s11 = sld [smem:[#allocation0]]
  $region89: #{tpu_custom_call.1} parent=0
    _
  %s13 = ssub.s32 1, %s11
  %s14 = scalar_select 0, %s13, %s11
  %15 = sst [smem:[#allocation2]] %s0
  $region1: #{tpu_custom_call.1} parent=0
    #allocation3 [shape = 'u8[16384]{0}', space=vmem, size = 0x4000, scoped, tag = 'input window, operand 1']
    #allocation4 [shape = 's32[2]{0}', space=sflag, size = 0x8, scoped, tag = 'scoped memory for tpu_custom_call.1']
    #allocation5 [shape = 's32[2]{0}', space=sflag, size = 0x8, scoped, tag = 'scoped memory for tpu_custom_call.1']
    #allocation6 [shape = 'u8[16384]{0}', space=vmem, size = 0x4000, scoped, tag = 'input window, operand 2']
    #allocation7 [shape = 's32[2]{0}', space=sflag, size = 0x8, scoped, tag = 'scoped memory for tpu_custom_call.1']
    #allocation8 [shape = 'u8[16384]{0}', space=vmem, size = 0x4000, scoped, tag = 'input window, operand 4']
    #allocation9 [shape = 'u8[16384]{0}', space=vmem, size = 0x4000, scoped, tag = 'input window, operand 5']
    #allocation10 [shape = 's32[2]{0}', space=sflag, size = 0x8, scoped, tag = 'scoped memory for tpu_custom_call.1']
    #allocation11 [shape = 'u8[16384]{0}', space=vmem, size = 0x4000, scoped, tag = 'output window, operand 0']
    #allocation12 [shape = 'u8[16384]{0}', space=vmem, size = 0x4000, scoped, tag = 'output window, operand 1']
    #allocation13 [shape = 's32[2]{0}', space=sflag, size = 0x8, scoped, tag = 'scoped memory for tpu_custom_call.1']
    %16 = vsyncpa [#allocation4], 0
    %s17 = scalar_lea.sflag [#allocation4], 1
    %18 = vsyncpa %s17, 0
    %19 = vsyncpa [#allocation7], 0
    %s20 = scalar_lea.sflag [#allocation7], 1
    %21 = vsyncpa %s20, 0
    %22 = vsyncpa [#allocation10], 0
    %s23 = scalar_lea.sflag [#allocation10], 1
    %24 = vsyncpa %s23, 0
    %25 = vsyncpa [#allocation5], 0
    %s26 = scalar_lea.sflag [#allocation5], 1
    %27 = vsyncpa %s26, 0
    %28 = vsyncpa [#allocation13], 0
    %s29 = scalar_lea.sflag [#allocation13], 1
    %30 = vsyncpa %s29, 0
    loop: start=0, step=1, limit=4
    $region2: #{tpu_custom_call.1} parent=1 // loop_pre_header
      _
    $region3: #{tpu_custom_call.1} parent=1 // loop_header
      %s32 = sphi 0, %s36
      %p33 = scmp.ge.s32.totalorder %s32, 4
      %s40 = sphi 0, %s40
      %s42 = sphi 0, %s40
      %s43 = sphi 0, %s42
      %s57 = sphi 0, %s43
      %s63 = sphi 0, %s65
      %s66 = sphi 0, %s63
      %s67 = sphi 0, %s66
      %s83 = sphi 0, %s67
      %s89 = sphi 0, %s91
      %s92 = sphi 0, %s89
      %s93 = sphi 0, %s92
      %s109 = sphi 0, %s93
      %s115 = sphi 0, %s117
      %s118 = sphi 0, %s115
      %s119 = sphi 0, %s118
      %s135 = sphi 0, %s119
      %s141 = sphi 0, %s143
      %s144 = sphi 0, %s141
      %s145 = sphi 0, %s144
      %s161 = sphi 0, %s145
      %s167 = sphi 0, %s169
      %s170 = sphi 0, %s167
      %s171 = sphi 0, %s170
      %s187 = sphi 0, %s171
      %s191 = sphi 0, %s191
      %s193 = sphi 0, %s191
      %s194 = sphi 0, %s193
      %s208 = sphi 0, %s194
      %s212 = sphi 0, %s212
      %s214 = sphi 0, %s212
      %s215 = sphi 0, %s214
      %s229 = sphi 0, %s215
      %s235 = sphi 0, %s237
      %s238 = sphi 0, %s235
      %s239 = sphi 0, %s238
      %s255 = sphi 0, %s239
      %s261 = sphi 0, %s263
      %s264 = sphi 0, %s261
      %s265 = sphi 0, %s264
      %s281 = sphi 0, %s265
    $region4: #{tpu_custom_call.1} parent=1 // loop_header_branch
      %35 = sbr.rel (%p33) target = $region8
    $region5: #{tpu_custom_call.1} parent=1 // loop_body
      %s37 = ssub.s32 %s32, 1
      %s38 = ssub.s32 %s32, 2
      %s39 = sadd.s32 %s32, 1
      %s41 = sadd.s32 %s40, 1
      %p44 = scmp.eq.s32.totalorder %s32, 1
      %p45 = scmp.ne.s32.totalorder %s40, %s42
      %p46 = scmp.eq.s32.totalorder %s32, 0
      %p47 = por %p45, %p46
      %p48 = scmp.ne.s32.totalorder %s40, %s42
      %p49 = scmp.eq.s32.totalorder %s37, 1
      %p50 = por %p48, %p49
      %p51 = scmp.ne.s32.totalorder %s42, %s43
      %p52 = scmp.eq.s32.totalorder %s37, 0
      %p53 = por %p51, %p52
      %p54 = scmp.ne.s32.totalorder %s42, %s43
      %p55 = scmp.eq.s32.totalorder %s38, 1
      %p56 = por %p54, %p55
      %p58 = scmp.ne.s32.totalorder %s43, %s57
      %p59 = scmp.eq.s32.totalorder %s38, 0
      %p60 = por %p58, %p59
      %s61 = ssub.s32 %s32, %s39
      %p62 = scmp.eq.s32.totalorder %s61, 0
      %s64 = sadd.s32 %s63, 1
      %s65 = scalar_select %p62, %s63, %s64
      %p68 = pneg %p62
      %p69 = scmp.eq.s32.totalorder %s32, 1
      %p70 = por %p68, %p69
      %p71 = scmp.ne.s32.totalorder %s63, %s66
      %p72 = scmp.eq.s32.totalorder %s32, 0
      %p73 = por %p71, %p72
      %p74 = scmp.ne.s32.totalorder %s63, %s66
      %p75 = scmp.eq.s32.totalorder %s37, 1
      %p76 = por %p74, %p75
      %p77 = scmp.ne.s32.totalorder %s66, %s67
      %p78 = scmp.eq.s32.totalorder %s37, 0
      %p79 = por %p77, %p78
      %p80 = scmp.ne.s32.totalorder %s66, %s67
      %p81 = scmp.eq.s32.totalorder %s38, 1
      %p82 = por %p80, %p81
      %p84 = scmp.ne.s32.totalorder %s67, %s83
      %p85 = scmp.eq.s32.totalorder %s38, 0
      %p86 = por %p84, %p85
      %s87 = ssub.s32 %s32, %s39
      %p88 = scmp.eq.s32.totalorder %s87, 0
      %s90 = sadd.s32 %s89, 1
      %s91 = scalar_select %p88, %s89, %s90
      %p94 = pneg %p88
      %p95 = scmp.eq.s32.totalorder %s32, 1
      %p96 = por %p94, %p95
      %p97 = scmp.ne.s32.totalorder %s89, %s92
      %p98 = scmp.eq.s32.totalorder %s32, 0
      %p99 = por %p97, %p98
      %p100 = scmp.ne.s32.totalorder %s89, %s92
      %p101 = scmp.eq.s32.totalorder %s37, 1
      %p102 = por %p100, %p101
      %p103 = scmp.ne.s32.totalorder %s92, %s93
      %p104 = scmp.eq.s32.totalorder %s37, 0
      %p105 = por %p103, %p104
      %p106 = scmp.ne.s32.totalorder %s92, %s93
      %p107 = scmp.eq.s32.totalorder %s38, 1
      %p108 = por %p106, %p107
      %p110 = scmp.ne.s32.totalorder %s93, %s109
      %p111 = scmp.eq.s32.totalorder %s38, 0
      %p112 = por %p110, %p111
      %s113 = ssub.s32 %s32, %s39
      %p114 = scmp.eq.s32.totalorder %s113, 0
      %s116 = sadd.s32 %s115, 1
      %s117 = scalar_select %p114, %s115, %s116
      %p120 = pneg %p114
      %p121 = scmp.eq.s32.totalorder %s32, 1
      %p122 = por %p120, %p121
      %p123 = scmp.ne.s32.totalorder %s115, %s118
      %p124 = scmp.eq.s32.totalorder %s32, 0
      %p125 = por %p123, %p124
      %p126 = scmp.ne.s32.totalorder %s115, %s118
      %p127 = scmp.eq.s32.totalorder %s37, 1
      %p128 = por %p126, %p127
      %p129 = scmp.ne.s32.totalorder %s118, %s119
      %p130 = scmp.eq.s32.totalorder %s37, 0
      %p131 = por %p129, %p130
      %p132 = scmp.ne.s32.totalorder %s118, %s119
      %p133 = scmp.eq.s32.totalorder %s38, 1
      %p134 = por %p132, %p133
      %p136 = scmp.ne.s32.totalorder %s119, %s135
      %p137 = scmp.eq.s32.totalorder %s38, 0
      %p138 = por %p136, %p137
      %s139 = ssub.s32 %s32, %s39
      %p140 = scmp.eq.s32.totalorder %s139, 0
      %s142 = sadd.s32 %s141, 1
      %s143 = scalar_select %p140, %s141, %s142
      %p146 = pneg %p140
      %p147 = scmp.eq.s32.totalorder %s32, 1
      %p148 = por %p146, %p147
      %p149 = scmp.ne.s32.totalorder %s141, %s144
      %p150 = scmp.eq.s32.totalorder %s32, 0
      %p151 = por %p149, %p150
      %p152 = scmp.ne.s32.totalorder %s141, %s144
      %p153 = scmp.eq.s32.totalorder %s37, 1
      %p154 = por %p152, %p153
      %p155 = scmp.ne.s32.totalorder %s144, %s145
      %p156 = scmp.eq.s32.totalorder %s37, 0
      %p157 = por %p155, %p156
      %p158 = scmp.ne.s32.totalorder %s144, %s145
      %p159 = scmp.eq.s32.totalorder %s38, 1
      %p160 = por %p158, %p159
      %p162 = scmp.ne.s32.totalorder %s145, %s161
      %p163 = scmp.eq.s32.totalorder %s38, 0
      %p164 = por %p162, %p163
      %s165 = ssub.s32 %s32, %s39
      %p166 = scmp.eq.s32.totalorder %s165, 0
      %s168 = sadd.s32 %s167, 1
      %s169 = scalar_select %p166, %s167, %s168
      %p172 = pneg %p166
      %p173 = scmp.eq.s32.totalorder %s32, 1
      %p174 = por %p172, %p173
      %p175 = scmp.ne.s32.totalorder %s167, %s170
      %p176 = scmp.eq.s32.totalorder %s32, 0
      %p177 = por %p175, %p176
      %p178 = scmp.ne.s32.totalorder %s167, %s170
      %p179 = scmp.eq.s32.totalorder %s37, 1
      %p180 = por %p178, %p179
      %p181 = scmp.ne.s32.totalorder %s170, %s171
      %p182 = scmp.eq.s32.totalorder %s37, 0
      %p183 = por %p181, %p182
      %p184 = scmp.ne.s32.totalorder %s170, %s171
      %p185 = scmp.eq.s32.totalorder %s38, 1
      %p186 = por %p184, %p185
      %p188 = scmp.ne.s32.totalorder %s171, %s187
      %p189 = scmp.eq.s32.totalorder %s38, 0
      %p190 = por %p188, %p189
      %s192 = sadd.s32 %s191, 1
      %p195 = scmp.eq.s32.totalorder %s32, 1
      %p196 = scmp.ne.s32.totalorder %s191, %s193
      %p197 = scmp.eq.s32.totalorder %s32, 0
      %p198 = por %p196, %p197
      %p199 = scmp.ne.s32.totalorder %s191, %s193
      %p200 = scmp.eq.s32.totalorder %s37, 1
      %p201 = por %p199, %p200
      %p202 = scmp.ne.s32.totalorder %s193, %s194
      %p203 = scmp.eq.s32.totalorder %s37, 0
      %p204 = por %p202, %p203
      %p205 = scmp.ne.s32.totalorder %s193, %s194
      %p206 = scmp.eq.s32.totalorder %s38, 1
      %p207 = por %p205, %p206
      %p209 = scmp.ne.s32.totalorder %s194, %s208
      %p210 = scmp.eq.s32.totalorder %s38, 0
      %p211 = por %p209, %p210
      %s213 = sadd.s32 %s212, 1
      %p216 = scmp.eq.s32.totalorder %s32, 1
      %p217 = scmp.ne.s32.totalorder %s212, %s214
      %p218 = scmp.eq.s32.totalorder %s32, 0
      %p219 = por %p217, %p218
      %p220 = scmp.ne.s32.totalorder %s212, %s214
      %p221 = scmp.eq.s32.totalorder %s37, 1
      %p222 = por %p220, %p221
      %p223 = scmp.ne.s32.totalorder %s214, %s215
      %p224 = scmp.eq.s32.totalorder %s37, 0
      %p225 = por %p223, %p224
      %p226 = scmp.ne.s32.totalorder %s214, %s215
      %p227 = scmp.eq.s32.totalorder %s38, 1
      %p228 = por %p226, %p227
      %p230 = scmp.ne.s32.totalorder %s215, %s229
      %p231 = scmp.eq.s32.totalorder %s38, 0
      %p232 = por %p230, %p231
      %s233 = ssub.s32 %s32, %s39
      %p234 = scmp.eq.s32.totalorder %s233, 0
      %s236 = sadd.s32 %s235, 1
      %s237 = scalar_select %p234, %s235, %s236
      %p240 = pneg %p234
      %p241 = scmp.eq.s32.totalorder %s32, 1
      %p242 = por %p240, %p241
      %p243 = scmp.ne.s32.totalorder %s235, %s238
      %p244 = scmp.eq.s32.totalorder %s32, 0
      %p245 = por %p243, %p244
      %p246 = scmp.ne.s32.totalorder %s235, %s238
      %p247 = scmp.eq.s32.totalorder %s37, 1
      %p248 = por %p246, %p247
      %p249 = scmp.ne.s32.totalorder %s238, %s239
      %p250 = scmp.eq.s32.totalorder %s37, 0
      %p251 = por %p249, %p250
      %p252 = scmp.ne.s32.totalorder %s238, %s239
      %p253 = scmp.eq.s32.totalorder %s38, 1
      %p254 = por %p252, %p253
      %p256 = scmp.ne.s32.totalorder %s239, %s255
      %p257 = scmp.eq.s32.totalorder %s38, 0
      %p258 = por %p256, %p257
      %s259 = ssub.s32 %s32, %s39
      %p260 = scmp.eq.s32.totalorder %s259, 0
      %s262 = sadd.s32 %s261, 1
      %s263 = scalar_select %p260, %s261, %s262
      %p266 = pneg %p260
      %p267 = scmp.eq.s32.totalorder %s32, 1
      %p268 = por %p266, %p267
      %p269 = scmp.ne.s32.totalorder %s261, %s264
      %p270 = scmp.eq.s32.totalorder %s32, 0
      %p271 = por %p269, %p270
      %p272 = scmp.ne.s32.totalorder %s261, %s264
      %p273 = scmp.eq.s32.totalorder %s37, 1
      %p274 = por %p272, %p273
      %p275 = scmp.ne.s32.totalorder %s264, %s265
      %p276 = scmp.eq.s32.totalorder %s37, 0
      %p277 = por %p275, %p276
      %p278 = scmp.ne.s32.totalorder %s264, %s265
      %p279 = scmp.eq.s32.totalorder %s38, 1
      %p280 = por %p278, %p279
      %p282 = scmp.ne.s32.totalorder %s265, %s281
      %p283 = scmp.eq.s32.totalorder %s38, 0
      %p284 = por %p282, %p283
      %p285 = scmp.le.s32.totalorder 1, %s32
      %p286 = scmp.lt.s32.totalorder %s32, 3
      %p287 = pnand %p285, %p286
      %p288 = pneg %p287
      // Predicated region
      $region9: #{tpu_custom_call.1} parent=5 // pred_check
        _
      $region10: #{tpu_custom_call.1} parent=5 // pred_check_branch
        %290 = sbr.rel (%p287) target = $region12
      $region11: #{tpu_custom_call.1} parent=5 // pred_region
        %s291 = ssub.s32 %s32, 1
        // Predicated region
        $region13: #{tpu_custom_call.1} parent=11 // pred_check
          %p292 = pneg %p53
        $region14: #{tpu_custom_call.1} parent=11 // pred_check_branch
          %294 = sbr.rel (%p292) target = $region16
        $region15: #{tpu_custom_call.1} parent=11 // pred_region
          _
        $region16: #{tpu_custom_call.1} parent=11 // pred_fallthru
          _
        // Predicated region
        $region17: #{tpu_custom_call.1} parent=11 // pred_check
          %p295 = pneg %p204
        $region18: #{tpu_custom_call.1} parent=11 // pred_check_branch
          %297 = sbr.rel (%p295) target = $region20
        $region19: #{tpu_custom_call.1} parent=11 // pred_region
          _
        $region20: #{tpu_custom_call.1} parent=11 // pred_fallthru
          _
        // Predicated region
        $region21: #{tpu_custom_call.1} parent=11 // pred_check
          %p298 = pneg %p225
        $region22: #{tpu_custom_call.1} parent=11 // pred_check_branch
          %300 = sbr.rel (%p298) target = $region24
        $region23: #{tpu_custom_call.1} parent=11 // pred_region
          _
        $region24: #{tpu_custom_call.1} parent=11 // pred_fallthru
          _
      $region12: #{tpu_custom_call.1} parent=5 // pred_fallthru
        _
      %p301 = scmp.lt.s32.totalorder %s32, 2
      // Predicated region
      $region25: #{tpu_custom_call.1} parent=5 // pred_check
        %p302 = pneg %p301
      $region26: #{tpu_custom_call.1} parent=5 // pred_check_branch
        %304 = sbr.rel (%p302) target = $region28
      $region27: #{tpu_custom_call.1} parent=5 // pred_region
        // Predicated region
        $region29: #{tpu_custom_call.1} parent=27 // pred_check
          %p305 = pneg %p73
        $region30: #{tpu_custom_call.1} parent=27 // pred_check_branch
          %307 = sbr.rel (%p305) target = $region32
        $region31: #{tpu_custom_call.1} parent=27 // pred_region
          %s308 = sand.u32 %s63, 1
          %s309 = scalar_lea.sflag [#allocation4], %s308
          %s310 = sand.u32 %s63, 1
          %s311 = smul.addr %s310, 16
          %s312 = scalar_lea.vmem [#allocation3], %s311
          %s314 = ssub.s32 256, 256
          %315 = vsyncadd %s309, %s314
          %s316 = smul.addr %s32, 2
          %s317 = smul.addr %s316, 128
          %s318 = scalar_lea.hbm %s1, %s317
          %s319 = sshll.u32 %s312, 4
          %s320 = int_to_ptr.vmem [resolvable:$true] %s319
          %325 = dma.hbm_to_vmem [thread:$0]  %s318, 256, %s320, %s309, 128, 128, 8
        $region32: #{tpu_custom_call.1} parent=27 // pred_fallthru
          _
        // Predicated region
        $region33: #{tpu_custom_call.1} parent=27 // pred_check
          %p326 = pneg %p99
        $region34: #{tpu_custom_call.1} parent=27 // pred_check_branch
          %328 = sbr.rel (%p326) target = $region36
        $region35: #{tpu_custom_call.1} parent=27 // pred_region
          %s329 = sand.u32 %s32, 1
          %s330 = scalar_lea.sflag [#allocation7], %s329
          %s331 = sand.u32 %s89, 1
          %s332 = smul.addr %s331, 16
          %s333 = scalar_lea.vmem [#allocation6], %s332
          %s335 = ssub.s32 256, 256
          %336 = vsyncadd %s330, %s335
          %s337 = smul.addr %s32, 2
          %s338 = smul.addr %s337, 128
          %s339 = scalar_lea.hbm %s2, %s338
          %s340 = sshll.u32 %s333, 4
          %s341 = int_to_ptr.vmem [resolvable:$true] %s340
          %346 = dma.hbm_to_vmem [thread:$0]  %s339, 256, %s341, %s330, 128, 128, 8
        $region36: #{tpu_custom_call.1} parent=27 // pred_fallthru
          _
        // Predicated region
        $region37: #{tpu_custom_call.1} parent=27 // pred_check
          %p347 = pneg %p125
        $region38: #{tpu_custom_call.1} parent=27 // pred_check_branch
          %349 = sbr.rel (%p347) target = $region40
        $region39: #{tpu_custom_call.1} parent=27 // pred_region
          %p350 = scmp.lt.s32.totalorder %s32, 1
          %s351 = scalar_select %p350, %s32, 1
          %s352 = smul.addr %s351, 2
          %s353 = smul.addr %s352, 8
          %s354 = scalar_lea.vmem %s3, %s353
        $region40: #{tpu_custom_call.1} parent=27 // pred_fallthru
          _
        // Predicated region
        $region41: #{tpu_custom_call.1} parent=27 // pred_check
          %p355 = pneg %p151
        $region42: #{tpu_custom_call.1} parent=27 // pred_check_branch
          %357 = sbr.rel (%p355) target = $region44
        $region43: #{tpu_custom_call.1} parent=27 // pred_region
          %s358 = sand.u32 %s32, 1
          %s359 = scalar_lea.sflag [#allocation7], %s358
          %s360 = sand.u32 %s141, 1
          %s361 = smul.addr %s360, 16
          %s362 = scalar_lea.vmem [#allocation8], %s361
          %s364 = ssub.s32 256, 256
          %365 = vsyncadd %s359, %s364
          %s366 = smul.addr %s32, 2
          %s367 = smul.addr %s366, 128
          %s368 = scalar_lea.hbm %s4, %s367
          %s369 = sshll.u32 %s362, 4
          %s370 = int_to_ptr.vmem [resolvable:$true] %s369
          %375 = dma.hbm_to_vmem [thread:$0]  %s368, 256, %s370, %s359, 128, 128, 8
        $region44: #{tpu_custom_call.1} parent=27 // pred_fallthru
          _
        // Predicated region
        $region45: #{tpu_custom_call.1} parent=27 // pred_check
          %p376 = pneg %p177
        $region46: #{tpu_custom_call.1} parent=27 // pred_check_branch
          %378 = sbr.rel (%p376) target = $region48
        $region47: #{tpu_custom_call.1} parent=27 // pred_region
          %s379 = sand.u32 %s167, 1
          %s380 = scalar_lea.sflag [#allocation10], %s379
          %s381 = sand.u32 %s167, 1
          %s382 = smul.addr %s381, 16
          %s383 = scalar_lea.vmem [#allocation9], %s382
          %s385 = ssub.s32 256, 256
          %386 = vsyncadd %s380, %s385
          %s387 = smul.addr %s32, 2
          %s388 = smul.addr %s387, 128
          %s389 = scalar_lea.hbm %s5, %s388
          %s390 = sshll.u32 %s383, 4
          %s391 = int_to_ptr.vmem [resolvable:$true] %s390
          %396 = dma.hbm_to_vmem [thread:$0]  %s389, 256, %s391, %s380, 128, 128, 8
        $region48: #{tpu_custom_call.1} parent=27 // pred_fallthru
          _
      $region28: #{tpu_custom_call.1} parent=5 // pred_fallthru
        _
      %p397 = scmp.le.s32.totalorder 1, %s32
      %p398 = scmp.lt.s32.totalorder %s32, 3
      %p399 = pnand %p397, %p398
      %p400 = pneg %p399
      // Predicated region
      $region49: #{tpu_custom_call.1} parent=5 // pred_check
        _
      $region50: #{tpu_custom_call.1} parent=5 // pred_check_branch
        %402 = sbr.rel (%p399) target = $region52
      $region51: #{tpu_custom_call.1} parent=5 // pred_region
        %s403 = ssub.s32 %s32, 1
        %s404 = sand.u32 %s66, 1
        %s405 = scalar_lea.sflag [#allocation4], %s404
        %s406 = sand.u32 %s66, 1
        %s407 = smul.addr %s406, 16
        %s408 = scalar_lea.vmem [#allocation3], %s407
        // Predicated region
        $region53: #{tpu_custom_call.1} parent=51 // pred_check
          %p409 = pneg %p79
        $region54: #{tpu_custom_call.1} parent=51 // pred_check_branch
          %411 = sbr.rel (%p409) target = $region56
        $region55: #{tpu_custom_call.1} parent=51 // pred_region
          %412 = dma.done %s405, 256
        $region56: #{tpu_custom_call.1} parent=51 // pred_fallthru
          _
        %s413 = sand.u32 %s37, 1
        %s414 = scalar_lea.sflag [#allocation7], %s413
        %s415 = sand.u32 %s92, 1
        %s416 = smul.addr %s415, 16
        %s417 = scalar_lea.vmem [#allocation6], %s416
        // Predicated region
        $region57: #{tpu_custom_call.1} parent=51 // pred_check
          %p418 = pneg %p105
        $region58: #{tpu_custom_call.1} parent=51 // pred_check_branch
          %420 = sbr.rel (%p418) target = $region60
        $region59: #{tpu_custom_call.1} parent=51 // pred_region
          %421 = dma.done %s414, 256
        $region60: #{tpu_custom_call.1} parent=51 // pred_fallthru
          _
        %s422 = sand.u32 %s37, 1
        %s423 = scalar_lea.sflag [#allocation7], %s422
        %s424 = sand.u32 %s144, 1
        %s425 = smul.addr %s424, 16
        %s426 = scalar_lea.vmem [#allocation8], %s425
        // Predicated region
        $region61: #{tpu_custom_call.1} parent=51 // pred_check
          %p427 = pneg %p157
        $region62: #{tpu_custom_call.1} parent=51 // pred_check_branch
          %429 = sbr.rel (%p427) target = $region64
        $region63: #{tpu_custom_call.1} parent=51 // pred_region
          %430 = dma.done %s423, 256
        $region64: #{tpu_custom_call.1} parent=51 // pred_fallthru
          _
        %s431 = sand.u32 %s170, 1
        %s432 = scalar_lea.sflag [#allocation10], %s431
        %s433 = sand.u32 %s170, 1
        %s434 = smul.addr %s433, 16
        %s435 = scalar_lea.vmem [#allocation9], %s434
        // Predicated region
        $region65: #{tpu_custom_call.1} parent=51 // pred_check
          %p436 = pneg %p183
        $region66: #{tpu_custom_call.1} parent=51 // pred_check_branch
          %438 = sbr.rel (%p436) target = $region68
        $region67: #{tpu_custom_call.1} parent=51 // pred_region
          %439 = dma.done %s432, 256
        $region68: #{tpu_custom_call.1} parent=51 // pred_fallthru
          _
        %p440 = pneg %p53
        %p441 = pneg %p50
        %s442 = sand.u32 %s66, 1
        %s443 = scalar_lea.sflag [#allocation4], %s442
        %s444 = sand.u32 %s66, 1
        %s445 = smul.addr %s444, 16
        %s446 = scalar_lea.vmem [#allocation3], %s445
        %p447 = pneg %p79
        %p448 = pneg %p76
        %s449 = sand.u32 %s37, 1
        %s450 = scalar_lea.sflag [#allocation7], %s449
        %s451 = sand.u32 %s92, 1
        %s452 = smul.addr %s451, 16
        %s453 = scalar_lea.vmem [#allocation6], %s452
        %p454 = pneg %p105
        %p455 = pneg %p102
        %p456 = scmp.lt.s32.totalorder %s37, 1
        %s457 = scalar_select %p456, %s37, 1
        %s458 = smul.addr %s457, 2
        %s459 = smul.addr %s458, 8
        %s460 = scalar_lea.vmem %s3, %s459
        %p461 = pneg %p131
        %p462 = pneg %p128
        %s463 = sand.u32 %s37, 1
        %s464 = scalar_lea.sflag [#allocation7], %s463
        %s465 = sand.u32 %s144, 1
        %s466 = smul.addr %s465, 16
        %s467 = scalar_lea.vmem [#allocation8], %s466
        %p468 = pneg %p157
        %p469 = pneg %p154
        %s470 = sand.u32 %s170, 1
        %s471 = scalar_lea.sflag [#allocation10], %s470
        %s472 = sand.u32 %s170, 1
        %s473 = smul.addr %s472, 16
        %s474 = scalar_lea.vmem [#allocation9], %s473
        %p475 = pneg %p183
        %p476 = pneg %p180
        %p477 = pneg %p204
        %p478 = pneg %p201
        %p479 = pneg %p225
        %p480 = pneg %p222
        %p481 = pneg %p251
        %p482 = pneg %p248
        %s483 = sand.u32 %s238, 1
        %s484 = scalar_lea.sflag [#allocation5], %s483
        %s485 = sand.u32 %s238, 1
        %s486 = smul.addr %s485, 16
        %s487 = scalar_lea.vmem [#allocation11], %s486
        %p488 = pneg %p277
        %p489 = pneg %p274
        %s490 = sand.u32 %s264, 1
        %s491 = scalar_lea.sflag [#allocation13], %s490
        %s492 = sand.u32 %s264, 1
        %s493 = smul.addr %s492, 16
        %s494 = scalar_lea.vmem [#allocation12], %s493
        %p495 = scmp.lt.s32.totalorder %s37, 1
        %s496 = scalar_select %p495, %s37, 1
        %s497 = smul.addr %s496, 2
        %s498 = smul.addr %s497, 8
        %s499 = scalar_lea.vmem %s3, %s498
        %s501 = sld [smem:[#allocation2]]
        %s502 = ssub.f32 1.0, %s501
        %v503 = vld [vmem:[%s6] sm:$0xf]
        %v504 = vld [vmem:[%s6 + $0x4] sm:$0xf]
        %v505 = vld [vmem:[%s6 + $0x8] sm:$0xf]
        %v506 = vld [vmem:[%s6 + $0xc] sm:$0xf]
        %v507 = vld [vmem:[%s7] sm:$0xf]
        %v508 = vld [vmem:[%s7 + $0x4] sm:$0xf]
        %v509 = vld [vmem:[%s408] sm:$0xff]
        %v510 = vld [vmem:[%s408 + $0x8] sm:$0xff]
        %v511 = vpack.c.bf16 %v510, %v509
        %v516 = vunpack.c.l.b16 %v503
        %v517 = vunpack.c.l.b16 %v504
        %v518 = vunpack.c.l.b16 %v505
        %v519 = vunpack.c.l.b16 %v506
        %v520 = vpack.c.b16 %v517, %v516
        %v521 = vpack.c.b16 %v519, %v518
        %vm522 = vcmask 130048
        %v524 = vsel %vm522, %v520, 0
        %v527 = vsel %vm522, %v521, 0
        %529 = vmatprep.subr.bf16.mxu0 0
        %530 = vmatpush1.bf16.msra.mxu0 %v511
        %531 = vmatprep.subr.bf16.mxu0 0
        %532 = vmatpush1.bf16.msra.mxu0 0
        %533 = vmatprep.subr.bf16.mxu0 0
        %534 = vmatpush1.bf16.msra.mxu0 0
        %535 = vmatprep.subr.bf16.mxu0 0
        %536 = vmatpush1.bf16.msra.mxu0 0
        %537 = vmatprep.subr.bf16.mxu0 0
        %538 = vmatpush1.bf16.msra.mxu0 0
        %539 = vmatprep.subr.bf16.mxu0 0
        %540 = vmatpush1.bf16.msra.mxu0 0
        %541 = vmatprep.subr.bf16.mxu0 0
        %542 = vmatpush1.bf16.msra.mxu0 0
        %543 = vmatprep.subr.bf16.mxu0 0
        %544 = vmatpush1.bf16.msra.mxu0 0
        %545 = vmatprep.subr.bf16.mxu0 0
        %546 = vmatpush1.bf16.msra.mxu0 0
        %547 = vmatprep.subr.bf16.mxu0 0
        %548 = vmatpush1.bf16.msra.mxu0 0
        %549 = vmatprep.subr.bf16.mxu0 0
        %550 = vmatpush1.bf16.msra.mxu0 0
        %551 = vmatprep.subr.bf16.mxu0 0
        %552 = vmatpush1.bf16.msra.mxu0 0
        %553 = vmatprep.subr.bf16.mxu0 0
        %554 = vmatpush1.bf16.msra.mxu0 0
        %555 = vmatprep.subr.bf16.mxu0 0
        %556 = vmatpush1.bf16.msra.mxu0 0
        %557 = vmatprep.subr.bf16.mxu0 0
        %558 = vmatpush1.bf16.msra.mxu0 0
        %559 = vmatprep.subr.bf16.mxu0 0
        %560 = vmatpush1.bf16.msra.mxu0 0
        %561 = vmatprep.mubr.bf16.mxu0 0
        %562 = vmatmul.mubr.bf16.gmra.mrb[0].mxu0 %v524
        %v563 = vpop.f32.mrb[0].mxu0
        %v564 = vadd.f32 0.0, %v563
        %v565 = vpop.f32.mrb[0].mxu0
        %v566 = vpop.f32.mrb[0].mxu0
        %v567 = vadd.f32 0.0, %v566
        %v568 = vpop.f32.mrb[0].mxu0
        %569 = vmatprep.mubr.bf16.mxu0 0
        %570 = vmatmul.mubr.bf16.gmra.mrb[0].mxu0 %v527
        %v571 = vpop.f32.mrb[0].mxu0
        %v572 = vadd.f32 0.0, %v571
        %v573 = vpop.f32.mrb[0].mxu0
        %v574 = vpop.f32.mrb[0].mxu0
        %v575 = vadd.f32 0.0, %v574
        %v576 = vpop.f32.mrb[0].mxu0
        %577 = vdwg.mxu0
        %v578 = vld [vmem:[%s417] sm:$0xff]
        %v579 = vld [vmem:[%s417 + $0x8] sm:$0xff]
        %v580 = vpack.c.bf16 %v579, %v578
        %581 = vmatprep.subr.bf16.mxu0 0
        %582 = vmatpush1.bf16.msra.mxu0 %v580
        %583 = vmatprep.subr.bf16.mxu0 0
        %584 = vmatpush1.bf16.msra.mxu0 0
        %585 = vmatprep.subr.bf16.mxu0 0
        %586 = vmatpush1.bf16.msra.mxu0 0
        %587 = vmatprep.subr.bf16.mxu0 0
        %588 = vmatpush1.bf16.msra.mxu0 0
        %589 = vmatprep.subr.bf16.mxu0 0
        %590 = vmatpush1.bf16.msra.mxu0 0
        %591 = vmatprep.subr.bf16.mxu0 0
        %592 = vmatpush1.bf16.msra.mxu0 0
        %593 = vmatprep.subr.bf16.mxu0 0
        %594 = vmatpush1.bf16.msra.mxu0 0
        %595 = vmatprep.subr.bf16.mxu0 0
        %596 = vmatpush1.bf16.msra.mxu0 0
        %597 = vmatprep.subr.bf16.mxu0 0
        %598 = vmatpush1.bf16.msra.mxu0 0
        %599 = vmatprep.subr.bf16.mxu0 0
        %600 = vmatpush1.bf16.msra.mxu0 0
        %601 = vmatprep.subr.bf16.mxu0 0
        %602 = vmatpush1.bf16.msra.mxu0 0
        %603 = vmatprep.subr.bf16.mxu0 0
        %604 = vmatpush1.bf16.msra.mxu0 0
        %605 = vmatprep.subr.bf16.mxu0 0
        %606 = vmatpush1.bf16.msra.mxu0 0
        %607 = vmatprep.subr.bf16.mxu0 0
        %608 = vmatpush1.bf16.msra.mxu0 0
        %609 = vmatprep.subr.bf16.mxu0 0
        %610 = vmatpush1.bf16.msra.mxu0 0
        %611 = vmatprep.subr.bf16.mxu0 0
        %612 = vmatpush1.bf16.msra.mxu0 0
        %613 = vmatprep.mubr.bf16.mxu0 0
        %614 = vmatmul.mubr.bf16.gmra.mrb[0].mxu0 %v524
        %v615 = vpop.f32.mrb[0].mxu0
        %v616 = vadd.f32 0.0, %v615
        %v617 = vpop.f32.mrb[0].mxu0
        %v618 = vpop.f32.mrb[0].mxu0
        %v619 = vadd.f32 0.0, %v618
        %v620 = vpop.f32.mrb[0].mxu0
        %621 = vmatprep.mubr.bf16.mxu0 0
        %622 = vmatmul.mubr.bf16.gmra.mrb[0].mxu0 %v527
        %v623 = vpop.f32.mrb[0].mxu0
        %v624 = vadd.f32 0.0, %v623
        %v625 = vpop.f32.mrb[0].mxu0
        %v626 = vpop.f32.mrb[0].mxu0
        %v627 = vadd.f32 0.0, %v626
        %v628 = vpop.f32.mrb[0].mxu0
        %629 = vdwg.mxu0
        %v630 = vsub.f32 %v564, %v624
        %v631 = vsub.f32 %v567, %v627
        %v632 = vpack.c.bf16 %v631, %v630
        %v633 = vadd.f32 %v616, %v572
        %v634 = vadd.f32 %v619, %v575
        %v635 = vpack.c.bf16 %v634, %v633
        %v638 = vunpack.c.l.b16 %v507
        %v639 = vunpack.c.l.b16 %v508
        %v640 = vpack.c.b16 %v639, %v638
        %v643 = vsel %vm522, %v632, 0
        %645 = vmatprep.subr.bf16.mxu0 0
        %646 = vmatpush1.bf16.msra.mxu0 %v640
        %647 = vmatprep.subr.bf16.mxu0 0
        %648 = vmatpush1.bf16.msra.mxu0 0
        %649 = vmatprep.subr.bf16.mxu0 0
        %650 = vmatpush1.bf16.msra.mxu0 0
        %651 = vmatprep.subr.bf16.mxu0 0
        %652 = vmatpush1.bf16.msra.mxu0 0
        %653 = vmatprep.subr.bf16.mxu0 0
        %654 = vmatpush1.bf16.msra.mxu0 0
        %655 = vmatprep.subr.bf16.mxu0 0
        %656 = vmatpush1.bf16.msra.mxu0 0
        %657 = vmatprep.subr.bf16.mxu0 0
        %658 = vmatpush1.bf16.msra.mxu0 0
        %659 = vmatprep.subr.bf16.mxu0 0
        %660 = vmatpush1.bf16.msra.mxu0 0
        %661 = vmatprep.subr.bf16.mxu0 0
        %662 = vmatpush1.bf16.msra.mxu0 0
        %663 = vmatprep.subr.bf16.mxu0 0
        %664 = vmatpush1.bf16.msra.mxu0 0
        %665 = vmatprep.subr.bf16.mxu0 0
        %666 = vmatpush1.bf16.msra.mxu0 0
        %667 = vmatprep.subr.bf16.mxu0 0
        %668 = vmatpush1.bf16.msra.mxu0 0
        %669 = vmatprep.subr.bf16.mxu0 0
        %670 = vmatpush1.bf16.msra.mxu0 0
        %671 = vmatprep.subr.bf16.mxu0 0
        %672 = vmatpush1.bf16.msra.mxu0 0
        %673 = vmatprep.subr.bf16.mxu0 0
        %674 = vmatpush1.bf16.msra.mxu0 0
        %675 = vmatprep.subr.bf16.mxu0 0
        %676 = vmatpush1.bf16.msra.mxu0 0
        %677 = vmatprep.mubr.bf16.mxu0 0
        %678 = vmatmul.mubr.bf16.gmra.mrb[0].mxu0 %v643
        %v679 = vpop.f32.mrb[0].mxu0
        %v680 = vadd.f32 0.0, %v679
        %v681 = vpop.f32.mrb[0].mxu0
        %v682 = vpop.f32.mrb[0].mxu0
        %v683 = vadd.f32 0.0, %v682
        %v684 = vpop.f32.mrb[0].mxu0
        %685 = vdwg.mxu0
        %v687 = vsel %vm522, %v635, 0
        %689 = vmatprep.subr.bf16.mxu0 0
        %690 = vmatpush1.bf16.msra.mxu0 %v640
        %691 = vmatprep.subr.bf16.mxu0 0
        %692 = vmatpush1.bf16.msra.mxu0 0
        %693 = vmatprep.subr.bf16.mxu0 0
        %694 = vmatpush1.bf16.msra.mxu0 0
        %695 = vmatprep.subr.bf16.mxu0 0
        %696 = vmatpush1.bf16.msra.mxu0 0
        %697 = vmatprep.subr.bf16.mxu0 0
        %698 = vmatpush1.bf16.msra.mxu0 0
        %699 = vmatprep.subr.bf16.mxu0 0
        %700 = vmatpush1.bf16.msra.mxu0 0
        %701 = vmatprep.subr.bf16.mxu0 0
        %702 = vmatpush1.bf16.msra.mxu0 0
        %703 = vmatprep.subr.bf16.mxu0 0
        %704 = vmatpush1.bf16.msra.mxu0 0
        %705 = vmatprep.subr.bf16.mxu0 0
        %706 = vmatpush1.bf16.msra.mxu0 0
        %707 = vmatprep.subr.bf16.mxu0 0
        %708 = vmatpush1.bf16.msra.mxu0 0
        %709 = vmatprep.subr.bf16.mxu0 0
        %710 = vmatpush1.bf16.msra.mxu0 0
        %711 = vmatprep.subr.bf16.mxu0 0
        %712 = vmatpush1.bf16.msra.mxu0 0
        %713 = vmatprep.subr.bf16.mxu0 0
        %714 = vmatpush1.bf16.msra.mxu0 0
        %715 = vmatprep.subr.bf16.mxu0 0
        %716 = vmatpush1.bf16.msra.mxu0 0
        %717 = vmatprep.subr.bf16.mxu0 0
        %718 = vmatpush1.bf16.msra.mxu0 0
        %719 = vmatprep.subr.bf16.mxu0 0
        %720 = vmatpush1.bf16.msra.mxu0 0
        %721 = vmatprep.mubr.bf16.mxu0 0
        %722 = vmatmul.mubr.bf16.gmra.mrb[0].mxu0 %v687
        %v723 = vpop.f32.mrb[0].mxu0
        %v724 = vadd.f32 0.0, %v723
        %v725 = vpop.f32.mrb[0].mxu0
        %v726 = vpop.f32.mrb[0].mxu0
        %v727 = vadd.f32 0.0, %v726
        %v728 = vpop.f32.mrb[0].mxu0
        %729 = vdwg.mxu0
        %732 = vrot.lane.b32.xlu0 %v724, 112
        %v733 = vpop.permute.xlu0 %732
        %734 = vrot.lane.b32.xlu0 %v727, 112
        %v735 = vpop.permute.xlu0 %734
        %v738 = vsub.f32 %v680, %v733
        %v739 = vsub.f32 %v683, %v735
        %740 = vrot.lane.b32.xlu0 %v724, 16
        %v741 = vpop.permute.xlu0 %740
        %742 = vrot.lane.b32.xlu0 %v727, 16
        %v743 = vpop.permute.xlu0 %742
        %v746 = vadd.f32 %v680, %v741
        %v747 = vadd.f32 %v683, %v743
        %v748 = vld [vmem:[%s435] sm:$0xff]
        %v749 = vld [vmem:[%s435 + $0x8] sm:$0xff]
        %v750 = vstv %s502
        %v751 = vmul.f32 %v748, %v750
        %v752 = vmul.f32 %v749, %v750
        %v753 = vld [vmem:[%s499] sm:$0xff]
        %v754 = vld [vmem:[%s499 + $0x8] sm:$0xff]
        %v755 = vsub.f32 %v753, %v738
        %v756 = vsub.f32 %v754, %v739
        %v757 = vmul.f32 %v751, %v755
        %v758 = vmul.f32 %v752, %v756
        %v759 = vadd.f32 %v738, %v757
        %v760 = vadd.f32 %v739, %v758
        %v761 = vld [vmem:[%s426] sm:$0xff]
        %v762 = vld [vmem:[%s426 + $0x8] sm:$0xff]
        %765 = vrot.lane.b32.xlu0 %v746, 112
        %v766 = vpop.permute.xlu0 %765
        %767 = vrot.lane.b32.xlu0 %v747, 112
        %v768 = vpop.permute.xlu0 %767
        %v771 = vsub.f32 %v761, %v766
        %v772 = vsub.f32 %v762, %v768
        %v773 = vmul.f32 %v751, %v771
        %v774 = vmul.f32 %v752, %v772
        %777 = vrot.lane.b32.xlu0 %v773, 16
        %v778 = vpop.permute.xlu0 %777
        %779 = vrot.lane.b32.xlu0 %v774, 16
        %v780 = vpop.permute.xlu0 %779
        %v783 = vadd.f32 %v746, %v778
        %v784 = vadd.f32 %v747, %v780
        %v785 = vpack.c.bf16 %v760, %v759
        %786 = vmatprep.subr.bf16.mxu0 0
        %787 = vmatpush1.bf16.msra.mxu0 %v785
        %788 = vmatprep.subr.bf16.mxu0 0
        %789 = vmatpush1.bf16.msra.mxu0 0
        %790 = vmatprep.subr.bf16.mxu0 0
        %791 = vmatpush1.bf16.msra.mxu0 0
        %792 = vmatprep.subr.bf16.mxu0 0
        %793 = vmatpush1.bf16.msra.mxu0 0
        %794 = vmatprep.subr.bf16.mxu0 0
        %795 = vmatpush1.bf16.msra.mxu0 0
        %796 = vmatprep.subr.bf16.mxu0 0
        %797 = vmatpush1.bf16.msra.mxu0 0
        %798 = vmatprep.subr.bf16.mxu0 0
        %799 = vmatpush1.bf16.msra.mxu0 0
        %800 = vmatprep.subr.bf16.mxu0 0
        %801 = vmatpush1.bf16.msra.mxu0 0
        %802 = vmatprep.subr.bf16.mxu0 0
        %803 = vmatpush1.bf16.msra.mxu0 0
        %804 = vmatprep.subr.bf16.mxu0 0
        %805 = vmatpush1.bf16.msra.mxu0 0
        %806 = vmatprep.subr.bf16.mxu0 0
        %807 = vmatpush1.bf16.msra.mxu0 0
        %808 = vmatprep.subr.bf16.mxu0 0
        %809 = vmatpush1.bf16.msra.mxu0 0
        %810 = vmatprep.subr.bf16.mxu0 0
        %811 = vmatpush1.bf16.msra.mxu0 0
        %812 = vmatprep.subr.bf16.mxu0 0
        %813 = vmatpush1.bf16.msra.mxu0 0
        %814 = vmatprep.subr.bf16.mxu0 0
        %815 = vmatpush1.bf16.msra.mxu0 0
        %816 = vmatprep.subr.bf16.mxu0 0
        %817 = vmatpush1.bf16.msra.mxu0 0
        %818 = vmatprep.mubr.bf16.mxu0 0
        %819 = vmatmul.mubr.bf16.gmra.mrb[0].mxu0 %v524
        %v820 = vpop.f32.mrb[0].mxu0
        %v821 = vadd.f32 0.0, %v820
        %v822 = vpop.f32.mrb[0].mxu0
        %v823 = vpop.f32.mrb[0].mxu0
        %v824 = vadd.f32 0.0, %v823
        %v825 = vpop.f32.mrb[0].mxu0
        %826 = vmatprep.mubr.bf16.mxu0 0
        %827 = vmatmul.mubr.bf16.gmra.mrb[0].mxu0 %v527
        %v828 = vpop.f32.mrb[0].mxu0
        %v829 = vadd.f32 0.0, %v828
        %v830 = vpop.f32.mrb[0].mxu0
        %v831 = vpop.f32.mrb[0].mxu0
        %v832 = vadd.f32 0.0, %v831
        %v833 = vpop.f32.mrb[0].mxu0
        %834 = vdwg.mxu0
        %v835 = vpack.c.bf16 %v784, %v783
        %837 = vrot.lane.b32.xlu0 %v835, 112
        %v838 = vpop.permute.xlu0 %837
        %840 = vmatprep.subr.bf16.mxu0 0
        %841 = vmatpush1.bf16.msra.mxu0 %v838
        %842 = vmatprep.subr.bf16.mxu0 0
        %843 = vmatpush1.bf16.msra.mxu0 0
        %844 = vmatprep.subr.bf16.mxu0 0
        %845 = vmatpush1.bf16.msra.mxu0 0
        %846 = vmatprep.subr.bf16.mxu0 0
        %847 = vmatpush1.bf16.msra.mxu0 0
        %848 = vmatprep.subr.bf16.mxu0 0
        %849 = vmatpush1.bf16.msra.mxu0 0
        %850 = vmatprep.subr.bf16.mxu0 0
        %851 = vmatpush1.bf16.msra.mxu0 0
        %852 = vmatprep.subr.bf16.mxu0 0
        %853 = vmatpush1.bf16.msra.mxu0 0
        %854 = vmatprep.subr.bf16.mxu0 0
        %855 = vmatpush1.bf16.msra.mxu0 0
        %856 = vmatprep.subr.bf16.mxu0 0
        %857 = vmatpush1.bf16.msra.mxu0 0
        %858 = vmatprep.subr.bf16.mxu0 0
        %859 = vmatpush1.bf16.msra.mxu0 0
        %860 = vmatprep.subr.bf16.mxu0 0
        %861 = vmatpush1.bf16.msra.mxu0 0
        %862 = vmatprep.subr.bf16.mxu0 0
        %863 = vmatpush1.bf16.msra.mxu0 0
        %864 = vmatprep.subr.bf16.mxu0 0
        %865 = vmatpush1.bf16.msra.mxu0 0
        %866 = vmatprep.subr.bf16.mxu0 0
        %867 = vmatpush1.bf16.msra.mxu0 0
        %868 = vmatprep.subr.bf16.mxu0 0
        %869 = vmatpush1.bf16.msra.mxu0 0
        %870 = vmatprep.subr.bf16.mxu0 0
        %871 = vmatpush1.bf16.msra.mxu0 0
        %872 = vmatprep.mubr.bf16.mxu0 0
        %873 = vmatmul.mubr.bf16.gmra.mrb[0].mxu0 %v524
        %v874 = vpop.f32.mrb[0].mxu0
        %v875 = vadd.f32 0.0, %v874
        %v876 = vpop.f32.mrb[0].mxu0
        %v877 = vpop.f32.mrb[0].mxu0
        %v878 = vadd.f32 0.0, %v877
        %v879 = vpop.f32.mrb[0].mxu0
        %880 = vmatprep.mubr.bf16.mxu0 0
        %881 = vmatmul.mubr.bf16.gmra.mrb[0].mxu0 %v527
        %v882 = vpop.f32.mrb[0].mxu0
        %v883 = vadd.f32 0.0, %v882
        %v884 = vpop.f32.mrb[0].mxu0
        %v885 = vpop.f32.mrb[0].mxu0
        %v886 = vadd.f32 0.0, %v885
        %v887 = vpop.f32.mrb[0].mxu0
        %888 = vdwg.mxu0
        %v889 = vadd.f32 %v821, %v883
        %v890 = vadd.f32 %v824, %v886
        %v891 = vpack.c.bf16 %v890, %v889
        %v892 = vsub.f32 %v875, %v829
        %v893 = vsub.f32 %v878, %v832
        %v894 = vpack.c.bf16 %v893, %v892
        %v896 = vsel %vm522, %v891, 0
        %898 = vmatprep.subr.bf16.mxu0 0
        %899 = vmatpush1.bf16.msra.mxu0 %v640
        %900 = vmatprep.subr.bf16.mxu0 0
        %901 = vmatpush1.bf16.msra.mxu0 0
        %902 = vmatprep.subr.bf16.mxu0 0
        %903 = vmatpush1.bf16.msra.mxu0 0
        %904 = vmatprep.subr.bf16.mxu0 0
        %905 = vmatpush1.bf16.msra.mxu0 0
        %906 = vmatprep.subr.bf16.mxu0 0
        %907 = vmatpush1.bf16.msra.mxu0 0
        %908 = vmatprep.subr.bf16.mxu0 0
        %909 = vmatpush1.bf16.msra.mxu0 0
        %910 = vmatprep.subr.bf16.mxu0 0
        %911 = vmatpush1.bf16.msra.mxu0 0
        %912 = vmatprep.subr.bf16.mxu0 0
        %913 = vmatpush1.bf16.msra.mxu0 0
        %914 = vmatprep.subr.bf16.mxu0 0
        %915 = vmatpush1.bf16.msra.mxu0 0
        %916 = vmatprep.subr.bf16.mxu0 0
        %917 = vmatpush1.bf16.msra.mxu0 0
        %918 = vmatprep.subr.bf16.mxu0 0
        %919 = vmatpush1.bf16.msra.mxu0 0
        %920 = vmatprep.subr.bf16.mxu0 0
        %921 = vmatpush1.bf16.msra.mxu0 0
        %922 = vmatprep.subr.bf16.mxu0 0
        %923 = vmatpush1.bf16.msra.mxu0 0
        %924 = vmatprep.subr.bf16.mxu0 0
        %925 = vmatpush1.bf16.msra.mxu0 0
        %926 = vmatprep.subr.bf16.mxu0 0
        %927 = vmatpush1.bf16.msra.mxu0 0
        %928 = vmatprep.subr.bf16.mxu0 0
        %929 = vmatpush1.bf16.msra.mxu0 0
        %930 = vmatprep.mubr.bf16.mxu0 0
        %931 = vmatmul.mubr.bf16.gmra.mrb[0].mxu0 %v896
        %v932 = vpop.f32.mrb[0].mxu0
        %v933 = vadd.f32 0.0, %v932
        %v934 = vpop.f32.mrb[0].mxu0
        %v935 = vpop.f32.mrb[0].mxu0
        %v936 = vadd.f32 0.0, %v935
        %v937 = vpop.f32.mrb[0].mxu0
        %938 = vdwg.mxu0
        %v940 = vsel %vm522, %v894, 0
        %942 = vmatprep.subr.bf16.mxu0 0
        %943 = vmatpush1.bf16.msra.mxu0 %v640
        %944 = vmatprep.subr.bf16.mxu0 0
        %945 = vmatpush1.bf16.msra.mxu0 0
        %946 = vmatprep.subr.bf16.mxu0 0
        %947 = vmatpush1.bf16.msra.mxu0 0
        %948 = vmatprep.subr.bf16.mxu0 0
        %949 = vmatpush1.bf16.msra.mxu0 0
        %950 = vmatprep.subr.bf16.mxu0 0
        %951 = vmatpush1.bf16.msra.mxu0 0
        %952 = vmatprep.subr.bf16.mxu0 0
        %953 = vmatpush1.bf16.msra.mxu0 0
        %954 = vmatprep.subr.bf16.mxu0 0
        %955 = vmatpush1.bf16.msra.mxu0 0
        %956 = vmatprep.subr.bf16.mxu0 0
        %957 = vmatpush1.bf16.msra.mxu0 0
        %958 = vmatprep.subr.bf16.mxu0 0
        %959 = vmatpush1.bf16.msra.mxu0 0
        %960 = vmatprep.subr.bf16.mxu0 0
        %961 = vmatpush1.bf16.msra.mxu0 0
        %962 = vmatprep.subr.bf16.mxu0 0
        %963 = vmatpush1.bf16.msra.mxu0 0
        %964 = vmatprep.subr.bf16.mxu0 0
        %965 = vmatpush1.bf16.msra.mxu0 0
        %966 = vmatprep.subr.bf16.mxu0 0
        %967 = vmatpush1.bf16.msra.mxu0 0
        %968 = vmatprep.subr.bf16.mxu0 0
        %969 = vmatpush1.bf16.msra.mxu0 0
        %970 = vmatprep.subr.bf16.mxu0 0
        %971 = vmatpush1.bf16.msra.mxu0 0
        %972 = vmatprep.subr.bf16.mxu0 0
        %973 = vmatpush1.bf16.msra.mxu0 0
        %974 = vmatprep.mubr.bf16.mxu0 0
        %975 = vmatmul.mubr.bf16.gmra.mrb[0].mxu0 %v940
        %v976 = vpop.f32.mrb[0].mxu0
        %v977 = vadd.f32 0.0, %v976
        %v978 = vpop.f32.mrb[0].mxu0
        %v979 = vpop.f32.mrb[0].mxu0
        %v980 = vadd.f32 0.0, %v979
        %v981 = vpop.f32.mrb[0].mxu0
        %982 = vdwg.mxu0
        %985 = vrot.lane.b32.xlu0 %v977, 112
        %v986 = vpop.permute.xlu0 %985
        %987 = vrot.lane.b32.xlu0 %v980, 112
        %v988 = vpop.permute.xlu0 %987
        %v991 = vadd.f32 %v933, %v986
        %v992 = vadd.f32 %v936, %v988
        %v993 = vmul.f32 %v991, 0.00390625
        %v994 = vmul.f32 %v992, 0.00390625
        %997 = vrot.lane.b32.xlu0 %v933, 112
        %v998 = vpop.permute.xlu0 %997
        %999 = vrot.lane.b32.xlu0 %v936, 112
        %v1000 = vpop.permute.xlu0 %999
        %v1003 = vsub.f32 %v977, %v998
        %v1004 = vsub.f32 %v980, %v1000
        %v1005 = vmul.f32 %v1003, 0.00390625
        %v1006 = vmul.f32 %v1004, 0.00390625
        %1007 = vst.msk [vmem:[%s487] sm:$0xff] %vm522, %v993
        %1008 = vst.msk [vmem:[%s487 + $0x8] sm:$0xff] %vm522, %v994
        %1009 = vst.msk [vmem:[%s494] sm:$0xff] %vm522, %v1005
        %1010 = vst.msk [vmem:[%s494 + $0x8] sm:$0xff] %vm522, %v1006
        %s1011 = sand.u32 %s238, 1
        %s1012 = scalar_lea.sflag [#allocation5], %s1011
        %s1013 = sand.u32 %s238, 1
        %s1014 = smul.addr %s1013, 16
        %s1015 = scalar_lea.vmem [#allocation11], %s1014
        %s1016 = sand.u32 %s264, 1
        %s1017 = scalar_lea.sflag [#allocation13], %s1016
        %s1018 = sand.u32 %s264, 1
        %s1019 = smul.addr %s1018, 16
        %s1020 = scalar_lea.vmem [#allocation12], %s1019
        // Predicated region
        $region69: #{tpu_custom_call.1} parent=51 // pred_check
          %p1021 = pneg %p248
        $region70: #{tpu_custom_call.1} parent=51 // pred_check_branch
          %1023 = sbr.rel (%p1021) target = $region72
        $region71: #{tpu_custom_call.1} parent=51 // pred_region
          %s1025 = ssub.s32 256, 256
          %1026 = vsyncadd %s1012, %s1025
          %s1027 = smul.addr %s37, 2
          %s1028 = smul.addr %s1027, 128
          %s1029 = scalar_lea.hbm %s8, %s1028
          %s1030 = sshll.u32 %s1015, 4
          %s1031 = int_to_ptr.vmem [resolvable:$true] %s1030
          %1036 = dma.vmem_to_hbm [thread:$0]  %s1031, 256, %s1029, %s1012, 128, 128, 8
        $region72: #{tpu_custom_call.1} parent=51 // pred_fallthru
          _
        // Predicated region
        $region73: #{tpu_custom_call.1} parent=51 // pred_check
          %p1037 = pneg %p274
        $region74: #{tpu_custom_call.1} parent=51 // pred_check_branch
          %1039 = sbr.rel (%p1037) target = $region76
        $region75: #{tpu_custom_call.1} parent=51 // pred_region
          %s1041 = ssub.s32 256, 256
          %1042 = vsyncadd %s1017, %s1041
          %s1043 = smul.addr %s37, 2
          %s1044 = smul.addr %s1043, 128
          %s1045 = scalar_lea.hbm %s9, %s1044
          %s1046 = sshll.u32 %s1020, 4
          %s1047 = int_to_ptr.vmem [resolvable:$true] %s1046
          %1052 = dma.vmem_to_hbm [thread:$0]  %s1047, 256, %s1045, %s1017, 128, 128, 8
        $region76: #{tpu_custom_call.1} parent=51 // pred_fallthru
          _
      $region52: #{tpu_custom_call.1} parent=5 // pred_fallthru
        _
      %p1053 = scmp.le.s32.totalorder 2, %s32
      // Predicated region
      $region77: #{tpu_custom_call.1} parent=5 // pred_check
        %p1054 = pneg %p1053
      $region78: #{tpu_custom_call.1} parent=5 // pred_check_branch
        %1056 = sbr.rel (%p1054) target = $region80
      $region79: #{tpu_custom_call.1} parent=5 // pred_region
        %s1057 = ssub.s32 %s32, 2
        // Predicated region
        $region81: #{tpu_custom_call.1} parent=79 // pred_check
          %p1058 = pneg %p254
        $region82: #{tpu_custom_call.1} parent=79 // pred_check_branch
          %1060 = sbr.rel (%p1058) target = $region84
        $region83: #{tpu_custom_call.1} parent=79 // pred_region
          %s1061 = sand.u32 %s239, 1
          %s1062 = scalar_lea.sflag [#allocation5], %s1061
          %s1063 = sand.u32 %s239, 1
          %s1064 = smul.addr %s1063, 16
          %s1065 = scalar_lea.vmem [#allocation11], %s1064
          %1066 = dma.done %s1062, 256
        $region84: #{tpu_custom_call.1} parent=79 // pred_fallthru
          _
        // Predicated region
        $region85: #{tpu_custom_call.1} parent=79 // pred_check
          %p1067 = pneg %p280
        $region86: #{tpu_custom_call.1} parent=79 // pred_check_branch
          %1069 = sbr.rel (%p1067) target = $region88
        $region87: #{tpu_custom_call.1} parent=79 // pred_region
          %s1070 = sand.u32 %s265, 1
          %s1071 = scalar_lea.sflag [#allocation13], %s1070
          %s1072 = sand.u32 %s265, 1
          %s1073 = smul.addr %s1072, 16
          %s1074 = scalar_lea.vmem [#allocation12], %s1073
          %1075 = dma.done %s1071, 256
        $region88: #{tpu_custom_call.1} parent=79 // pred_fallthru
          _
      $region80: #{tpu_custom_call.1} parent=5 // pred_fallthru
        _
    $region6: #{tpu_custom_call.1} parent=1 // loop_footer
      %s36 = sadd.s32 1, %s32
    $region7: #{tpu_custom_call.1} parent=1 // loop_footer_branch
      %31 = sbr.rel target = $region3
    $region8: #{tpu_custom_call.1} parent=1 // loop_exit
      _
    %1076 = vsyncpa [#allocation4], 1
    %s1077 = scalar_lea.sflag [#allocation4], 1
    %1078 = vsyncpa %s1077, 1
    %1079 = vsyncpa [#allocation7], 1
    %s1080 = scalar_lea.sflag [#allocation7], 1
    %1081 = vsyncpa %s1080, 1
    %1082 = vsyncpa [#allocation10], 1
    %s1083 = scalar_lea.sflag [#allocation10], 1
    %1084 = vsyncpa %s1083, 1
    %1085 = vsyncpa [#allocation5], 1
    %s1086 = scalar_lea.sflag [#allocation5], 1
    %1087 = vsyncpa %s1086, 1
    %1088 = vsyncpa [#allocation13], 1
    %s1089 = scalar_lea.sflag [#allocation13], 1
    %1090 = vsyncpa %s1089, 1

</llo_original>
